<compile_context>
chip_gen: v5e
topology: v5e:2x2
jax: 0.10.0
libtpu: 0.0.40
codegen_flags: <defaults>
</compile_context>

<pallas_src>
import functools

import jax
import jax.numpy as jnp
from jax.experimental import pallas as pl
from jax.experimental.pallas import tpu as pltpu


def _round_up(n, m):
    return ((n + m - 1) // m) * m


def classifier_kernel(x_ref, w_ref, b_ref, out_ref, pred_ref):
    x = x_ref[...]            # [TM, D]  f32 batch tile (double-buffered stream)
    w = w_ref[...]            # [1, D]   f32 lane-dense weight row (resident)
    b = b_ref[0]              # scalar bias from 1-D SMEM

    # logits[0, t] = sum_d w[0, d] * x[t, d]  ->  lane-dense [1, TM]
    logits = jax.lax.dot_general(
        w, x,
        dimension_numbers=(((1,), (1,)), ((), ())),
        preferred_element_type=jnp.float32,
    ) + b                                                    # [1, TM]

    # Dense (unmasked) stores: batch is on the lane axis of both outputs.
    out_ref[...] = logits[None].astype(out_ref.dtype)                    # [1,1,TM]
    pred_ref[...] = jax.nn.sigmoid(logits)[None].astype(pred_ref.dtype)  # [1,1,TM]


@functools.partial(jax.jit, static_argnames=("tm",))
def classifier_forward(x, w, b, *, tm=512):
    """x: [B, D] f32, w: [1, D] f32 (PyTorch Linear weight layout), b: [1] f32."""
    B, D = x.shape
    # Tile size: multiple of 8 sublanes, capped at 512 (f32 streaming sweet spot).
    TM = min(tm, _round_up(B, 8))
    B_pad = _round_up(B, TM)
    if B_pad != B:
        x = jnp.pad(x, ((0, B_pad - B), (0, 0)))
    G = pl.cdiv(B_pad, TM)

    out_rows, pred_rows = pl.pallas_call(
        classifier_kernel,
        out_shape=(
            jax.ShapeDtypeStruct((G, 1, TM), jnp.float32),   # logits (lane-dense slabs)
            jax.ShapeDtypeStruct((G, 1, TM), jnp.float32),   # sigmoid(logits)
        ),
        grid_spec=pltpu.PrefetchScalarGridSpec(
            num_scalar_prefetch=0,
            grid=(G,),
            in_specs=[
                pl.BlockSpec((TM, D), lambda i: (i, 0)),     # x tile, pipelined
                pl.BlockSpec((1, D), lambda i: (0, 0)),      # weight row, resident
                pl.BlockSpec(memory_space=pltpu.SMEM),       # 1-D scalar bias
            ],
            out_specs=[
                pl.BlockSpec((1, 1, TM), lambda i: (i, 0, 0)),
                pl.BlockSpec((1, 1, TM), lambda i: (i, 0, 0)),
            ],
        ),
        compiler_params=pltpu.CompilerParams(
            # Batch tiles are independent -> shard across both TCs on v7x.
            dimension_semantics=("parallel",),
        ),
    )(x, w, b)

    out = out_rows.reshape(B_pad, 1)[:B]
    preds = pred_rows.reshape(B_pad, 1)[:B]
    end_points = {"Predictions": preds}
    return out, end_points


if __name__ == "__main__":
    DIM = 128   # flags['hd'] == 1  ->  dim = 128
    key = jax.random.PRNGKey(0)
    k_x, k_w, k_b, k_x2 = jax.random.split(key, 4)

    # Deterministic, PyTorch-Linear-like uniform init.
    bound = DIM ** -0.5
    w = jax.random.uniform(k_w, (1, DIM), jnp.float32, -bound, bound)  # Linear weight [1, D]
    b = jax.random.uniform(k_b, (1,), jnp.float32, -bound, bound)      # bias, 1-D for SMEM

    def reference(xx):
        r_out = xx @ w.T + b[0]
        return r_out, jax.nn.sigmoid(r_out)

    # Small batch (single tile).
    x = jax.random.normal(k_x, (8, DIM), jnp.float32)
    out, end_points = classifier_forward(x, w, b)
    jax.block_until_ready(out)
    jax.block_until_ready(end_points["Predictions"])
    ref_out, ref_pred = reference(x)
    assert out.shape == (8, 1)
    assert jnp.allclose(out, ref_out, atol=1e-4), "logits mismatch (B=8)"
    assert jnp.allclose(end_points["Predictions"], ref_pred, atol=1e-4), "sigmoid mismatch (B=8)"

    # Larger, non-multiple-of-tile batch: exercises batch tiling + padding path.
    x2 = jax.random.normal(k_x2, (640, DIM), jnp.float32)
    out2, ep2 = classifier_forward(x2, w, b)
    jax.block_until_ready(out2)
    jax.block_until_ready(ep2["Predictions"])
    ref_out2, ref_pred2 = reference(x2)
    assert out2.shape == (640, 1)
    assert jnp.allclose(out2, ref_out2, atol=1e-4), "logits mismatch (B=640)"
    assert jnp.allclose(ep2["Predictions"], ref_pred2, atol=1e-4), "sigmoid mismatch (B=640)"

    print("KERNEL_OK")
</pallas_src>

<mosaic_0001>
module attributes {stable_mosaic.version = 11 : i64} {
  func.func @classifier_kernel(%arg0: i32, %arg1: memref<8x128xf32, #tpu.memory_space<vmem>>, %arg2: memref<1x128xf32, #tpu.memory_space<vmem>>, %arg3: memref<1xf32, #tpu.memory_space<smem>>, %arg4: memref<1x1x8xf32, #tpu.memory_space<vmem>>, %arg5: memref<1x1x8xf32, #tpu.memory_space<vmem>>) attributes {dimension_semantics = [#tpu.dimension_semantics<parallel>], iteration_bounds = array<i64: 1>, scalar_prefetch = 0 : i64, scratch_operands = 0 : i64, tpu.core_type = #tpu.core_type<tc>, window_params = [{transform_indices = @transform_0, window_bounds = array<i64: 8, 128>}, {pipeline_mode = #tpu.pipeline_mode<synchronous>, transform_indices = @transform_1, window_bounds = array<i64: 1, 128>}, {transform_indices = @transform_2, window_bounds = array<i64: 1>}, {transform_indices = @transform_3, window_bounds = array<i64: 1, 1, 8>}, {transform_indices = @transform_4, window_bounds = array<i64: 1, 1, 8>}]} {
    %c0 = arith.constant 0 : index
    %c0_0 = arith.constant 0 : index
    %0 = vector.load %arg1[%c0, %c0_0] : memref<8x128xf32, #tpu.memory_space<vmem>>, vector<8x128xf32>
    %c0_1 = arith.constant 0 : index
    %c0_2 = arith.constant 0 : index
    %1 = vector.load %arg2[%c0_1, %c0_2] : memref<1x128xf32, #tpu.memory_space<vmem>>, vector<1x128xf32>
    %c0_3 = arith.constant 0 : index
    %2 = memref.load %arg3[%c0_3] : memref<1xf32, #tpu.memory_space<smem>>
    %cst = arith.constant dense<0.000000e+00> : vector<1x8xf32>
    %3 = tpu.matmul %1, %0, %cst {dimension_numbers = #tpu.dot_dimension_numbers<[1], [1], [0], [0], [0, 0, 1, 0], [], []>} : vector<1x128xf32>, vector<8x128xf32>, vector<1x8xf32> -> vector<1x8xf32>
    %4 = vector.broadcast %2 : f32 to vector<1x8xf32>
    %5 = arith.addf %3, %4 : vector<1x8xf32>
    %6 = vector.shape_cast %5 : vector<1x8xf32> to vector<1x1x8xf32>
    %c0_4 = arith.constant 0 : index
    %c0_5 = arith.constant 0 : index
    %c0_6 = arith.constant 0 : index
    %7 = vector.load %arg4[%c0_4, %c0_5, %c0_6] : memref<1x1x8xf32, #tpu.memory_space<vmem>>, vector<1x1x8xf32>
    tpu.vector_store %arg4[%c0_4, %c0_5, %c0_6], %6 {strides = array<i32>} : memref<1x1x8xf32, #tpu.memory_space<vmem>>, vector<1x1x8xf32>,
    %8 = arith.negf %5 : vector<1x8xf32>
    %9 = math.exp %8 : vector<1x8xf32>
    %cst_7 = arith.constant 1.000000e+00 : f32
    %10 = vector.broadcast %cst_7 : f32 to vector<1x8xf32>
    %11 = arith.addf %10, %9 : vector<1x8xf32>
    %12 = arith.divf %10, %11 : vector<1x8xf32>
    %13 = vector.shape_cast %12 : vector<1x8xf32> to vector<1x1x8xf32>
    %c0_8 = arith.constant 0 : index
    %c0_9 = arith.constant 0 : index
    %c0_10 = arith.constant 0 : index
    %14 = vector.load %arg5[%c0_8, %c0_9, %c0_10] : memref<1x1x8xf32, #tpu.memory_space<vmem>>, vector<1x1x8xf32>
    tpu.vector_store %arg5[%c0_8, %c0_9, %c0_10], %13 {strides = array<i32>} : memref<1x1x8xf32, #tpu.memory_space<vmem>>, vector<1x1x8xf32>,
    return
  }
  func.func @transform_0(%arg0: i32) -> (i32, i32) {
    %c0_i32 = arith.constant 0 : i32
    %c0_i32_0 = arith.constant 0 : i32
    return %arg0, %c0_i32 : i32, i32
  }
  func.func @transform_1(%arg0: i32) -> (i32, i32) {
    %c0_i32 = arith.constant 0 : i32
    %c0_i32_0 = arith.constant 0 : i32
    %c0_i32_1 = arith.constant 0 : i32
    return %c0_i32, %c0_i32_0 : i32, i32
  }
  func.func @transform_2(%arg0: i32) -> i32 {
    %c0_i32 = arith.constant 0 : i32
    %c0_i32_0 = arith.constant 0 : i32
    return %c0_i32 : i32
  }
  func.func @transform_3(%arg0: i32) -> (i32, i32, i32) {
    %c0_i32 = arith.constant 0 : i32
    %c0_i32_0 = arith.constant 0 : i32
    %c0_i32_1 = arith.constant 0 : i32
    return %arg0, %c0_i32, %c0_i32_0 : i32, i32, i32
  }
  func.func @transform_4(%arg0: i32) -> (i32, i32, i32) {
    %c0_i32 = arith.constant 0 : i32
    %c0_i32_0 = arith.constant 0 : i32
    %c0_i32_1 = arith.constant 0 : i32
    return %arg0, %c0_i32, %c0_i32_0 : i32, i32, i32
  }
}

</mosaic_0001>

<llo_original>
// kernel: classifier_forward.1
$region0: #{classifier_forward.1}
  #allocation0 [shape = 'u32[]', space=smem, size = 0x4, offset = 0x4, fixed_abs, tag = 'smem constant byte address 0x4 - core index']
  #allocation1 [shape = 'u32[72,128]{1,0:T(1,128)}', space=vmem, size = 0x9000, scoped, tag = 'internal scratch']
  #allocation2 [shape = 'f32[1]{0:T(128)S(6)}', space=smem, size = 0x200, scoped, tag = 'scoped memory for classifier_forward.1']
  %s0 = inlined_call_operand.hbm [shape: f32[8,128], index: 0, kind: input, shape index: {}]
  %s1 = inlined_call_operand.vmem [shape: f32[1,128], index: 1, kind: input, shape index: {}]
  %s2 = inlined_call_operand.<no memory space> [shape: f32[1], index: 2, kind: input, shape index: {}]
  %s3 = inlined_call_operand.hbm [shape: f32[1,1,8], index: 3, kind: output, shape index: {0}]
  %s4 = inlined_call_operand.hbm [shape: f32[1,1,8], index: 4, kind: output, shape index: {1}]
  %5 = xla_tuple %s3, %s4
  %s6 = sld [smem:[#allocation0]]
  $region34: #{classifier_forward.1} parent=0
    _
  %s8 = ssub.s32 1, %s6
  %s9 = scalar_select 0, %s8, %s6
  %10 = sst [smem:[#allocation2]] %s2
  $region1: #{classifier_forward.1} parent=0
    #allocation3 [shape = 'u8[4096]{0}', space=vmem, size = 0x1000, scoped, tag = 'input window, operand 0, single buffered']
    #allocation4 [shape = 's32[1]{0}', space=sflag, size = 0x4, scoped, tag = 'scoped memory for classifier_forward.1']
    #allocation5 [shape = 's32[1]{0}', space=sflag, size = 0x4, scoped, tag = 'scoped memory for classifier_forward.1']
    #allocation6 [shape = 'u8[512]{0}', space=vmem, size = 0x400, scoped, tag = 'output window, operand 0, single buffered']
    #allocation7 [shape = 'u8[512]{0}', space=vmem, size = 0x400, scoped, tag = 'output window, operand 1, single buffered']
    #allocation8 [shape = 's32[1]{0}', space=sflag, size = 0x4, scoped, tag = 'scoped memory for classifier_forward.1']
    %11 = vsyncpa [#allocation4], 0
    %12 = vsyncpa [#allocation5], 0
    %13 = vsyncpa [#allocation8], 0
    // Predicated region
    $region2: #{classifier_forward.1} parent=1 // pred_check
      _
    $region3: #{classifier_forward.1} parent=1 // pred_check_branch
      %15 = sbr.rel (0) target = $region5
    $region4: #{classifier_forward.1} parent=1 // pred_region
      %17 = vsyncadd [#allocation4], 0
      %s19 = sshll.u32 %s0, 4
      %s20 = int_to_ptr.hbm [resolvable:$true] %s19
      %s21 = sshll.u32 [#allocation3], 4
      %s22 = int_to_ptr.vmem [resolvable:$true] %s21
      %24 = dma.hbm_to_vmem [thread:$0]  %s20, 128, %s22, [#allocation4]
    $region5: #{classifier_forward.1} parent=1 // pred_fallthru
      _
    // Predicated region
    $region6: #{classifier_forward.1} parent=1 // pred_check
      _
    $region7: #{classifier_forward.1} parent=1 // pred_check_branch
      %26 = sbr.rel (0) target = $region9
    $region8: #{classifier_forward.1} parent=1 // pred_region
      _
    $region9: #{classifier_forward.1} parent=1 // pred_fallthru
      _
    // Predicated region
    $region10: #{classifier_forward.1} parent=1 // pred_check
      _
    $region11: #{classifier_forward.1} parent=1 // pred_check_branch
      %28 = sbr.rel (0) target = $region13
    $region12: #{classifier_forward.1} parent=1 // pred_region
      _
    $region13: #{classifier_forward.1} parent=1 // pred_fallthru
      _
    // Predicated region
    $region14: #{classifier_forward.1} parent=1 // pred_check
      _
    $region15: #{classifier_forward.1} parent=1 // pred_check_branch
      %30 = sbr.rel (0) target = $region17
    $region16: #{classifier_forward.1} parent=1 // pred_region
      %32 = dma.done [#allocation4], 128
    $region17: #{classifier_forward.1} parent=1 // pred_fallthru
      _
    %v33 = vld [vmem:[#allocation3] sm:$0xff]
    %v34 = vld [vmem:[%s1] sm:$0x1]
    %s35 = sld [smem:[#allocation2]]
    %v36 = vstv %s35
    %37 = vmatpush.xpose.msra.mxu0 0.0
    %38 = vmatpush.xpose.msra.mxu0 0.0
    %39 = vmatpush.xpose.msra.mxu0 0.0
    %40 = vmatpush.xpose.msra.mxu0 0.0
    %41 = vmatpush.xpose.msra.mxu0 0.0
    %42 = vmatpush.xpose.msra.mxu0 0.0
    %43 = vmatpush.xpose.msra.mxu0 0.0
    %44 = vmatpush.xpose.msra.mxu0 0.0
    %45 = vmatpush.xpose.msra.mxu0 0.0
    %46 = vmatpush.xpose.msra.mxu0 0.0
    %47 = vmatpush.xpose.msra.mxu0 0.0
    %48 = vmatpush.xpose.msra.mxu0 0.0
    %49 = vmatpush.xpose.msra.mxu0 0.0
    %50 = vmatpush.xpose.msra.mxu0 0.0
    %51 = vmatpush.xpose.msra.mxu0 0.0
    %52 = vmatpush.xpose.msra.mxu0 %v33
    %53 = vmatmul.f32.gmra.mxu0 %v34
    %v54 = vpop.f32.mrf.mxu0
    %v55 = vadd.f32 %v36, %v54
    %56 = vdwg.mxu0
    %vm57 = vcmask 57344
    %58 = vst.msk [vmem:[#allocation6] sm:$0x1] %vm57, %v55
    %v59 = vxor.u32 %v55, 2147483648
    %v60 = vmul.f32 %v59, 1.442695
    %v61 = vpow.pop %v60
    %v62 = vadd.f32 %v61, 1.0
    %v63 = vrcp.pop %v62
    %v64 = vmul.f32 %v62, %v63
    %v65 = vsub.f32 1.0, %v64
    %v66 = vmul.f32 %v63, %v65
    %v67 = vadd.f32 %v63, %v66
    %vm68 = vweird.f32 %v62
    %vm69 = vweird.f32 %v63
    %vm70 = vmor %vm68, %vm69
    %v71 = vsel %vm70, %v63, %v67
    %v72 = vand.u32 2147483647, %v62
    %vm73 = vcmp.eq.f32.partialorder %v72, 8.507059e+37
    %v74 = vand.u32 %v62, 2147483648
    %v75 = vor.u32 1.1754944e-38, %v74
    %v76 = vsel %vm73, %v75, %v71
    %v77 = vmul.f32 1.0, %v76
    %78 = vst.msk [vmem:[#allocation7] sm:$0x1] %vm57, %v77
    // Predicated region
    $region18: #{classifier_forward.1} parent=1 // pred_check
      _
    $region19: #{classifier_forward.1} parent=1 // pred_check_branch
      %80 = sbr.rel (0) target = $region21
    $region20: #{classifier_forward.1} parent=1 // pred_region
      %82 = vsyncadd [#allocation5], 0
      %s84 = sshll.u32 [#allocation6], 4
      %s85 = int_to_ptr.vmem [resolvable:$true] %s84
      %s86 = sshll.u32 %s3, 4
      %s87 = int_to_ptr.hbm [resolvable:$true] %s86
      %89 = dma.vmem_to_hbm [thread:$0]  %s85, 16, %s87, [#allocation5]
    $region21: #{classifier_forward.1} parent=1 // pred_fallthru
      _
    // Predicated region
    $region22: #{classifier_forward.1} parent=1 // pred_check
      _
    $region23: #{classifier_forward.1} parent=1 // pred_check_branch
      %91 = sbr.rel (0) target = $region25
    $region24: #{classifier_forward.1} parent=1 // pred_region
      %93 = vsyncadd [#allocation8], 0
      %s95 = sshll.u32 [#allocation7], 4
      %s96 = int_to_ptr.vmem [resolvable:$true] %s95
      %s97 = sshll.u32 %s4, 4
      %s98 = int_to_ptr.hbm [resolvable:$true] %s97
      %100 = dma.vmem_to_hbm [thread:$0]  %s96, 16, %s98, [#allocation8]
    $region25: #{classifier_forward.1} parent=1 // pred_fallthru
      _
    // Predicated region
    $region26: #{classifier_forward.1} parent=1 // pred_check
      _
    $region27: #{classifier_forward.1} parent=1 // pred_check_branch
      %102 = sbr.rel (0) target = $region29
    $region28: #{classifier_forward.1} parent=1 // pred_region
      %104 = dma.done [#allocation5], 16
    $region29: #{classifier_forward.1} parent=1 // pred_fallthru
      _
    // Predicated region
    $region30: #{classifier_forward.1} parent=1 // pred_check
      _
    $region31: #{classifier_forward.1} parent=1 // pred_check_branch
      %106 = sbr.rel (0) target = $region33
    $region32: #{classifier_forward.1} parent=1 // pred_region
      %108 = dma.done [#allocation8], 16
    $region33: #{classifier_forward.1} parent=1 // pred_fallthru
      _
    %109 = vsyncpa [#allocation4], 1
    %110 = vsyncpa [#allocation5], 1
    %111 = vsyncpa [#allocation8], 1

</llo_original>
